<compile_context>
chip_gen: v6e
topology: v6e:2x2x1
jax: 0.10.0
libtpu: 0.0.40
codegen_flags: <defaults>
</compile_context>

<pallas_src>
import jax
import jax.numpy as jnp
from jax.experimental import pallas as pl
from jax.experimental.pallas import tpu as pltpu

_EPS = 1e-5  # PyTorch BatchNorm2d default eps


def down_pallas(x_nchw, w1_oihw, b1, g1, be1, w2_oihw, b2, g2, be2):
    """Fused `down` forward. x_nchw: (N, Cin, H, W) f32, weights in PyTorch OIHW.
    Returns (N, Cout, H//2, W//2) f32 (NCHW)."""
    N, Cin, H, W = x_nchw.shape
    assert H % 2 == 0 and W % 2 == 0, "MaxPool2d(2) path assumes even H, W"
    Cout = w1_oihw.shape[0]
    assert Cout % 8 == 0, "sublane-aligned im2col assumes out_ch % 8 == 0"
    Ho, Wo = H // 2, W // 2
    Hp, Wp = Ho + 2, Wo + 2                    # spatially zero-padded (conv halo)
    M = N * Ho * Wo                            # true element count per channel (BN)
    Mp = N * Hp * Wp                           # padded flat spatial size
    Mp_pad = ((Mp + 127) // 128) * 128         # lane-dense (multiple of 128)
    Cin_p = ((Cin + 7) // 8) * 8               # sublane-aligned channel count

    # Conv bias cancels exactly under training-mode BatchNorm (mean subtraction):
    # dropped as dead work; validated against the biased reference below.
    del b1, b2

    f32 = jnp.float32
    x = x_nchw.astype(f32)

    # ---- layout plumbing (model boundary only; keep this layout between layers) ----
    # input -> corner-major, channel-padded, spatially zero-padded, lane-dense:
    #   (N, Cin, H, W) -> (4[pool corner], Cin_p, Mp_pad), column = n*Hp*Wp + hp*Wp + wp
    xr = x.reshape(N, Cin, Ho, 2, Wo, 2)
    corners = jnp.transpose(xr, (3, 5, 1, 0, 2, 4))            # (2, 2, Cin, N, Ho, Wo)
    xc = jnp.zeros((2, 2, Cin_p, N, Hp, Wp), f32)
    xc = xc.at[:, :, :Cin, :, 1:Ho + 1, 1:Wo + 1].set(corners)
    xc = xc.reshape(4, Cin_p, Mp)
    xc = jnp.pad(xc, ((0, 0), (0, 0), (0, Mp_pad - Mp)))       # (4, Cin_p, Mp_pad)

    # valid-column mask: 1.0 at the M real output positions, 0 at halo / lane padding
    msk = jnp.zeros((1, N, Hp, Wp), f32).at[:, :, 1:Ho + 1, 1:Wo + 1].set(1.0)
    msk = jnp.pad(msk.reshape(1, Mp), ((0, 0), (0, Mp_pad - Mp)))   # (1, Mp_pad)

    # weights -> (Cout, K) with K ordered (ky, kx, cin) to match the im2col tap order;
    # bf16 MXU operands (f32 accumulation in the kernel).
    def wt(w_oihw, cin, cin_p):
        o = w_oihw.shape[0]
        w = jnp.transpose(w_oihw, (0, 2, 3, 1)).astype(f32)    # (O, ky, kx, I)
        w = jnp.pad(w, ((0, 0), (0, 0), (0, 0), (0, cin_p - cin)))
        return w.reshape(o, 9 * cin_p).astype(jnp.bfloat16)

    w1_2d = wt(w1_oihw, Cin, Cin_p)            # (Cout, 9*Cin_p)
    w2_2d = wt(w2_oihw, Cout, Cout)            # (Cout, 9*Cout)
    col = lambda v: v.reshape(-1, 1).astype(f32)

    # ----------------------------- fused kernel -----------------------------
    def kernel(x_ref, m_ref, w1_ref, g1_ref, be1_ref, w2_ref, g2_ref, be2_ref, o_ref):
        mask = m_ref[...]                       # (1, Mp_pad), f32
        inv_m = 1.0 / float(M)

        # MaxPool2d(2): three lane-dense VPU maxima, zero relayout.  Halo/tail
        # columns are 0 in all four corners -> pooled halo is exactly conv1's
        # zero padding.
        p = jnp.maximum(jnp.maximum(x_ref[0], x_ref[1]),
                        jnp.maximum(x_ref[2], x_ref[3]))        # (Cin_p, Mp_pad)

        def im2col(z):
            # z: (8k, Mp_pad) zero-halo activation.  Nine 3x3 taps = static XLU lane
            # rotations; roll wrap-around only lands on halo/tail columns, which are
            # excluded from BN stats and re-zeroed before reuse.  Tap slabs are
            # 8-sublane aligned, so the concatenate needs no sublane re-packing.
            taps = []
            for dy in (-1, 0, 1):
                for dx in (-1, 0, 1):
                    off = dy * Wp + dx
                    t = z if off == 0 else pltpu.roll(z, shift=(-off) % Mp_pad, axis=1)
                    taps.append(t)
            return jnp.concatenate(taps, axis=0).astype(jnp.bfloat16)   # (9*rows, Mp_pad)

        def bn_relu(y, gamma, beta):
            # Training-mode BatchNorm2d folded into one FMA.  Centered two-pass
            # statistics over the M valid columns only (mask kills halo garbage).
            mu = jnp.sum(y * mask, axis=1, keepdims=True) * inv_m        # (Cout, 1)
            d = y - mu
            var = jnp.sum(d * d * mask, axis=1, keepdims=True) * inv_m
            scale = gamma * jax.lax.rsqrt(var + _EPS)
            shift = beta - mu * scale
            return jnp.maximum(y * scale + shift, 0.0)

        # conv1: single MXU matmul, K = 9*Cin_p, bf16 operands, f32 accumulation.
        y1 = jnp.dot(w1_ref[...], im2col(p), preferred_element_type=jnp.float32)
        # re-zero halo/tail so it acts as conv2's zero padding
        y1 = bn_relu(y1, g1_ref[...], be1_ref[...]) * mask

        # conv2: single MXU matmul, K = 9*Cout.
        y2 = jnp.dot(w2_ref[...], im2col(y1), preferred_element_type=jnp.float32)
        o_ref[...] = bn_relu(y2, g2_ref[...], be2_ref[...]) * mask   # lane-dense store

    def full(shape):
        r = len(shape)
        return pl.BlockSpec(shape, lambda i: (0,) * r)

    out2d = pl.pallas_call(
        kernel,
        out_shape=jax.ShapeDtypeStruct((Cout, Mp_pad), f32),
        grid=(1,),
        in_specs=[full(xc.shape), full(msk.shape),
                  full(w1_2d.shape), full((Cout, 1)), full((Cout, 1)),
                  full(w2_2d.shape), full((Cout, 1)), full((Cout, 1))],
        out_specs=full((Cout, Mp_pad)),
        compiler_params=pltpu.CompilerParams(dimension_semantics=("arbitrary",)),
    )(xc, msk, w1_2d, col(g1), col(be1), w2_2d, col(g2), col(be2))

    # padded channel-major slab -> PyTorch NCHW (model boundary only)
    out = out2d[:, :Mp].reshape(Cout, N, Hp, Wp)[:, :, 1:Ho + 1, 1:Wo + 1]
    return jnp.transpose(out, (1, 0, 2, 3))


def down_reference(x_nchw, w1_oihw, b1, g1, be1, w2_oihw, b2, g2, be2,
                   matmul_dtype=jnp.float32):
    """Pure-JAX reference with the exact module semantics (incl. conv bias).
    matmul_dtype=bfloat16 reproduces the kernel's MXU operand rounding (f32 acc)."""
    N, C, H, W = x_nchw.shape
    xp = x_nchw.reshape(N, C, H // 2, 2, W // 2, 2).max(axis=(3, 5))

    def block(z, w_oihw, cb, gamma, beta):
        w_hwio = jnp.transpose(w_oihw, (2, 3, 1, 0)).astype(matmul_dtype)
        y = jax.lax.conv_general_dilated(
            z.astype(matmul_dtype), w_hwio, (1, 1), "SAME",
            dimension_numbers=("NCHW", "HWIO", "NCHW"),
            preferred_element_type=jnp.float32)
        y = y + cb.reshape(1, -1, 1, 1)
        mu = jnp.mean(y, axis=(0, 2, 3), keepdims=True)
        var = jnp.mean((y - mu) ** 2, axis=(0, 2, 3), keepdims=True)
        yn = (y - mu) * jax.lax.rsqrt(var + _EPS)
        return jnp.maximum(yn * gamma.reshape(1, -1, 1, 1) + beta.reshape(1, -1, 1, 1), 0.0)

    y1 = block(xp, w1_oihw, b1, g1, be1)
    return block(y1, w2_oihw, b2, g2, be2)


if __name__ == "__main__":
    N, Cin, H, W, Cout = 2, 4, 16, 16, 8

    key = jax.random.PRNGKey(0)
    ks = jax.random.split(key, 9)

    # deterministic synthetic parameters for down(in_ch=4, out_ch=8), PyTorch conventions
    x = jax.random.normal(ks[0], (N, Cin, H, W), jnp.float32)              # NCHW input
    w1 = 0.2 * jax.random.normal(ks[1], (Cout, Cin, 3, 3), jnp.float32)    # OIHW
    b1 = 0.1 * jax.random.normal(ks[2], (Cout,), jnp.float32)
    g1 = 1.0 + 0.1 * jax.random.normal(ks[3], (Cout,), jnp.float32)
    be1 = 0.1 * jax.random.normal(ks[4], (Cout,), jnp.float32)
    w2 = 0.2 * jax.random.normal(ks[5], (Cout, Cout, 3, 3), jnp.float32)   # OIHW
    b2 = 0.1 * jax.random.normal(ks[6], (Cout,), jnp.float32)
    g2 = 1.0 + 0.1 * jax.random.normal(ks[7], (Cout,), jnp.float32)
    be2 = 0.1 * jax.random.normal(ks[8], (Cout,), jnp.float32)

    out = jax.block_until_ready(down_pallas(x, w1, b1, g1, be1, w2, b2, g2, be2))
    assert out.shape == (N, Cout, H // 2, W // 2), out.shape

    # Tight check vs a reference with the SAME bf16 MXU operand rounding (isolates
    # kernel correctness), plus a sanity bound vs the exact f32 module semantics
    # (slack accounts only for bf16 operand quantization of K=36/72 dot products).
    ref_bf16 = jax.block_until_ready(
        down_reference(x, w1, b1, g1, be1, w2, b2, g2, be2, matmul_dtype=jnp.bfloat16))
    ref_f32 = jax.block_until_ready(
        down_reference(x, w1, b1, g1, be1, w2, b2, g2, be2, matmul_dtype=jnp.float32))

    err_matched = float(jnp.max(jnp.abs(out - ref_bf16)))
    err_exact = float(jnp.max(jnp.abs(out - ref_f32)))
    assert err_matched < 2e-3, f"matched-dtype max abs error too large: {err_matched}"
    assert err_exact < 1e-1, f"exact-f32 max abs error too large: {err_exact}"

    print("KERNEL_OK")
</pallas_src>

<mosaic_0001>
module attributes {stable_mosaic.version = 11 : i64} {
  func.func @kernel(%arg0: i32, %arg1: memref<4x8x256xf32, #tpu.memory_space<vmem>>, %arg2: memref<1x256xf32, #tpu.memory_space<vmem>>, %arg3: memref<8x72xbf16, #tpu.memory_space<vmem>>, %arg4: memref<8x1xf32, #tpu.memory_space<vmem>>, %arg5: memref<8x1xf32, #tpu.memory_space<vmem>>, %arg6: memref<8x72xbf16, #tpu.memory_space<vmem>>, %arg7: memref<8x1xf32, #tpu.memory_space<vmem>>, %arg8: memref<8x1xf32, #tpu.memory_space<vmem>>, %arg9: memref<8x256xf32, #tpu.memory_space<vmem>>) attributes {dimension_semantics = [#tpu.dimension_semantics<arbitrary>], iteration_bounds = array<i64: 1>, scalar_prefetch = 0 : i64, scratch_operands = 0 : i64, tpu.core_type = #tpu.core_type<tc>, window_params = [{pipeline_mode = #tpu.pipeline_mode<synchronous>, transform_indices = @transform_0, window_bounds = array<i64: 4, 8, 256>}, {pipeline_mode = #tpu.pipeline_mode<synchronous>, transform_indices = @transform_1, window_bounds = array<i64: 1, 256>}, {pipeline_mode = #tpu.pipeline_mode<synchronous>, transform_indices = @transform_2, window_bounds = array<i64: 8, 72>}, {pipeline_mode = #tpu.pipeline_mode<synchronous>, transform_indices = @transform_3, window_bounds = array<i64: 8, 1>}, {pipeline_mode = #tpu.pipeline_mode<synchronous>, transform_indices = @transform_4, window_bounds = array<i64: 8, 1>}, {pipeline_mode = #tpu.pipeline_mode<synchronous>, transform_indices = @transform_5, window_bounds = array<i64: 8, 72>}, {pipeline_mode = #tpu.pipeline_mode<synchronous>, transform_indices = @transform_6, window_bounds = array<i64: 8, 1>}, {pipeline_mode = #tpu.pipeline_mode<synchronous>, transform_indices = @transform_7, window_bounds = array<i64: 8, 1>}, {pipeline_mode = #tpu.pipeline_mode<synchronous>, transform_indices = @transform_8, window_bounds = array<i64: 8, 256>}]} {
    %c0 = arith.constant 0 : index
    %c0_0 = arith.constant 0 : index
    %0 = vector.load %arg2[%c0, %c0_0] : memref<1x256xf32, #tpu.memory_space<vmem>>, vector<1x256xf32>
    %c0_1 = arith.constant 0 : index
    %c0_2 = arith.constant 0 : index
    %c0_3 = arith.constant 0 : index
    %1 = vector.load %arg1[%c0_1, %c0_2, %c0_3] : memref<4x8x256xf32, #tpu.memory_space<vmem>>, vector<1x8x256xf32>
    %2 = vector.shape_cast %1 : vector<1x8x256xf32> to vector<8x256xf32>
    %c1 = arith.constant 1 : index
    %c0_4 = arith.constant 0 : index
    %c0_5 = arith.constant 0 : index
    %3 = vector.load %arg1[%c1, %c0_4, %c0_5] : memref<4x8x256xf32, #tpu.memory_space<vmem>>, vector<1x8x256xf32>
    %4 = vector.shape_cast %3 : vector<1x8x256xf32> to vector<8x256xf32>
    %5 = arith.maximumf %2, %4 : vector<8x256xf32>
    %c2 = arith.constant 2 : index
    %c0_6 = arith.constant 0 : index
    %c0_7 = arith.constant 0 : index
    %6 = vector.load %arg1[%c2, %c0_6, %c0_7] : memref<4x8x256xf32, #tpu.memory_space<vmem>>, vector<1x8x256xf32>
    %7 = vector.shape_cast %6 : vector<1x8x256xf32> to vector<8x256xf32>
    %c3 = arith.constant 3 : index
    %c0_8 = arith.constant 0 : index
    %c0_9 = arith.constant 0 : index
    %8 = vector.load %arg1[%c3, %c0_8, %c0_9] : memref<4x8x256xf32, #tpu.memory_space<vmem>>, vector<1x8x256xf32>
    %9 = vector.shape_cast %8 : vector<1x8x256xf32> to vector<8x256xf32>
    %10 = arith.maximumf %7, %9 : vector<8x256xf32>
    %11 = arith.maximumf %5, %10 : vector<8x256xf32>
    %c0_10 = arith.constant 0 : index
    %c0_11 = arith.constant 0 : index
    %12 = vector.load %arg3[%c0_10, %c0_11] : memref<8x72xbf16, #tpu.memory_space<vmem>>, vector<8x72xbf16>
    %c11_i32 = arith.constant 11 : i32
    %13 = tpu.dynamic_rotate %11 by %c11_i32 dim 1 : vector<8x256xf32>, i32 -> vector<8x256xf32>
    %c10_i32 = arith.constant 10 : i32
    %14 = tpu.dynamic_rotate %11 by %c10_i32 dim 1 : vector<8x256xf32>, i32 -> vector<8x256xf32>
    %c9_i32 = arith.constant 9 : i32
    %15 = tpu.dynamic_rotate %11 by %c9_i32 dim 1 : vector<8x256xf32>, i32 -> vector<8x256xf32>
    %c1_i32 = arith.constant 1 : i32
    %16 = tpu.dynamic_rotate %11 by %c1_i32 dim 1 : vector<8x256xf32>, i32 -> vector<8x256xf32>
    %c255_i32 = arith.constant 255 : i32
    %17 = tpu.dynamic_rotate %11 by %c255_i32 dim 1 : vector<8x256xf32>, i32 -> vector<8x256xf32>
    %c247_i32 = arith.constant 247 : i32
    %18 = tpu.dynamic_rotate %11 by %c247_i32 dim 1 : vector<8x256xf32>, i32 -> vector<8x256xf32>
    %c246_i32 = arith.constant 246 : i32
    %19 = tpu.dynamic_rotate %11 by %c246_i32 dim 1 : vector<8x256xf32>, i32 -> vector<8x256xf32>
    %c245_i32 = arith.constant 245 : i32
    %20 = tpu.dynamic_rotate %11 by %c245_i32 dim 1 : vector<8x256xf32>, i32 -> vector<8x256xf32>
    %21 = tpu.concatenate %13, %14, %15, %16, %11, %17, %18, %19, %20 in 0 : vector<8x256xf32>, vector<8x256xf32>, vector<8x256xf32>, vector<8x256xf32>, vector<8x256xf32>, vector<8x256xf32>, vector<8x256xf32>, vector<8x256xf32>, vector<8x256xf32> -> vector<72x256xf32>
    %22 = arith.truncf %21 : vector<72x256xf32> to vector<72x256xbf16>
    %cst = arith.constant dense<0.000000e+00> : vector<8x256xf32>
    %23 = tpu.matmul %12, %22, %cst {dimension_numbers = #tpu.dot_dimension_numbers<[1], [0], [0], [1], [0, 0, 1, 1], [], []>} : vector<8x72xbf16>, vector<72x256xbf16>, vector<8x256xf32> -> vector<8x256xf32>
    %c0_12 = arith.constant 0 : index
    %c0_13 = arith.constant 0 : index
    %24 = vector.load %arg4[%c0_12, %c0_13] : memref<8x1xf32, #tpu.memory_space<vmem>>, vector<8x1xf32>
    %c0_14 = arith.constant 0 : index
    %c0_15 = arith.constant 0 : index
    %25 = vector.load %arg5[%c0_14, %c0_15] : memref<8x1xf32, #tpu.memory_space<vmem>>, vector<8x1xf32>
    %26 = vector.broadcast %0 : vector<1x256xf32> to vector<8x256xf32>
    %27 = arith.mulf %23, %26 : vector<8x256xf32>
    %cst_16 = arith.constant dense<0.000000e+00> : vector<8xf32>
    %28 = vector.multi_reduction <add>, %27, %cst_16 [1] : vector<8x256xf32> to vector<8xf32>
    %29 = vector.shape_cast %28 : vector<8xf32> to vector<8x1xf32>
    %cst_17 = arith.constant 7.812500e-03 : f32
    %30 = vector.broadcast %cst_17 : f32 to vector<8x1xf32>
    %31 = arith.mulf %29, %30 : vector<8x1xf32>
    %32 = vector.broadcast %31 : vector<8x1xf32> to vector<8x256xf32>
    %33 = arith.subf %23, %32 : vector<8x256xf32>
    %34 = arith.mulf %33, %33 : vector<8x256xf32>
    %35 = vector.broadcast %0 : vector<1x256xf32> to vector<8x256xf32>
    %36 = arith.mulf %34, %35 : vector<8x256xf32>
    %cst_18 = arith.constant dense<0.000000e+00> : vector<8xf32>
    %37 = vector.multi_reduction <add>, %36, %cst_18 [1] : vector<8x256xf32> to vector<8xf32>
    %38 = vector.shape_cast %37 : vector<8xf32> to vector<8x1xf32>
    %cst_19 = arith.constant 7.812500e-03 : f32
    %39 = vector.broadcast %cst_19 : f32 to vector<8x1xf32>
    %40 = arith.mulf %38, %39 : vector<8x1xf32>
    %cst_20 = arith.constant 9.99999974E-6 : f32
    %41 = vector.broadcast %cst_20 : f32 to vector<8x1xf32>
    %42 = arith.addf %40, %41 : vector<8x1xf32>
    %43 = math.rsqrt %42 : vector<8x1xf32>
    %44 = arith.mulf %24, %43 : vector<8x1xf32>
    %45 = arith.mulf %31, %44 : vector<8x1xf32>
    %46 = arith.subf %25, %45 : vector<8x1xf32>
    %47 = vector.broadcast %44 : vector<8x1xf32> to vector<8x256xf32>
    %48 = arith.mulf %23, %47 : vector<8x256xf32>
    %49 = vector.broadcast %46 : vector<8x1xf32> to vector<8x256xf32>
    %50 = arith.addf %48, %49 : vector<8x256xf32>
    %cst_21 = arith.constant 0.000000e+00 : f32
    %51 = vector.broadcast %cst_21 : f32 to vector<8x256xf32>
    %52 = arith.maximumf %50, %51 : vector<8x256xf32>
    %53 = vector.broadcast %0 : vector<1x256xf32> to vector<8x256xf32>
    %54 = arith.mulf %52, %53 : vector<8x256xf32>
    %c0_22 = arith.constant 0 : index
    %c0_23 = arith.constant 0 : index
    %55 = vector.load %arg6[%c0_22, %c0_23] : memref<8x72xbf16, #tpu.memory_space<vmem>>, vector<8x72xbf16>
    %c11_i32_24 = arith.constant 11 : i32
    %56 = tpu.dynamic_rotate %54 by %c11_i32_24 dim 1 : vector<8x256xf32>, i32 -> vector<8x256xf32>
    %c10_i32_25 = arith.constant 10 : i32
    %57 = tpu.dynamic_rotate %54 by %c10_i32_25 dim 1 : vector<8x256xf32>, i32 -> vector<8x256xf32>
    %c9_i32_26 = arith.constant 9 : i32
    %58 = tpu.dynamic_rotate %54 by %c9_i32_26 dim 1 : vector<8x256xf32>, i32 -> vector<8x256xf32>
    %c1_i32_27 = arith.constant 1 : i32
    %59 = tpu.dynamic_rotate %54 by %c1_i32_27 dim 1 : vector<8x256xf32>, i32 -> vector<8x256xf32>
    %c255_i32_28 = arith.constant 255 : i32
    %60 = tpu.dynamic_rotate %54 by %c255_i32_28 dim 1 : vector<8x256xf32>, i32 -> vector<8x256xf32>
    %c247_i32_29 = arith.constant 247 : i32
    %61 = tpu.dynamic_rotate %54 by %c247_i32_29 dim 1 : vector<8x256xf32>, i32 -> vector<8x256xf32>
    %c246_i32_30 = arith.constant 246 : i32
    %62 = tpu.dynamic_rotate %54 by %c246_i32_30 dim 1 : vector<8x256xf32>, i32 -> vector<8x256xf32>
    %c245_i32_31 = arith.constant 245 : i32
    %63 = tpu.dynamic_rotate %54 by %c245_i32_31 dim 1 : vector<8x256xf32>, i32 -> vector<8x256xf32>
    %64 = tpu.concatenate %56, %57, %58, %59, %54, %60, %61, %62, %63 in 0 : vector<8x256xf32>, vector<8x256xf32>, vector<8x256xf32>, vector<8x256xf32>, vector<8x256xf32>, vector<8x256xf32>, vector<8x256xf32>, vector<8x256xf32>, vector<8x256xf32> -> vector<72x256xf32>
    %65 = arith.truncf %64 : vector<72x256xf32> to vector<72x256xbf16>
    %cst_32 = arith.constant dense<0.000000e+00> : vector<8x256xf32>
    %66 = tpu.matmul %55, %65, %cst_32 {dimension_numbers = #tpu.dot_dimension_numbers<[1], [0], [0], [1], [0, 0, 1, 1], [], []>} : vector<8x72xbf16>, vector<72x256xbf16>, vector<8x256xf32> -> vector<8x256xf32>
    %c0_33 = arith.constant 0 : index
    %c0_34 = arith.constant 0 : index
    %67 = vector.load %arg7[%c0_33, %c0_34] : memref<8x1xf32, #tpu.memory_space<vmem>>, vector<8x1xf32>
    %c0_35 = arith.constant 0 : index
    %c0_36 = arith.constant 0 : index
    %68 = vector.load %arg8[%c0_35, %c0_36] : memref<8x1xf32, #tpu.memory_space<vmem>>, vector<8x1xf32>
    %69 = vector.broadcast %0 : vector<1x256xf32> to vector<8x256xf32>
    %70 = arith.mulf %66, %69 : vector<8x256xf32>
    %cst_37 = arith.constant dense<0.000000e+00> : vector<8xf32>
    %71 = vector.multi_reduction <add>, %70, %cst_37 [1] : vector<8x256xf32> to vector<8xf32>
    %72 = vector.shape_cast %71 : vector<8xf32> to vector<8x1xf32>
    %cst_38 = arith.constant 7.812500e-03 : f32
    %73 = vector.broadcast %cst_38 : f32 to vector<8x1xf32>
    %74 = arith.mulf %72, %73 : vector<8x1xf32>
    %75 = vector.broadcast %74 : vector<8x1xf32> to vector<8x256xf32>
    %76 = arith.subf %66, %75 : vector<8x256xf32>
    %77 = arith.mulf %76, %76 : vector<8x256xf32>
    %78 = vector.broadcast %0 : vector<1x256xf32> to vector<8x256xf32>
    %79 = arith.mulf %77, %78 : vector<8x256xf32>
    %cst_39 = arith.constant dense<0.000000e+00> : vector<8xf32>
    %80 = vector.multi_reduction <add>, %79, %cst_39 [1] : vector<8x256xf32> to vector<8xf32>
    %81 = vector.shape_cast %80 : vector<8xf32> to vector<8x1xf32>
    %cst_40 = arith.constant 7.812500e-03 : f32
    %82 = vector.broadcast %cst_40 : f32 to vector<8x1xf32>
    %83 = arith.mulf %81, %82 : vector<8x1xf32>
    %cst_41 = arith.constant 9.99999974E-6 : f32
    %84 = vector.broadcast %cst_41 : f32 to vector<8x1xf32>
    %85 = arith.addf %83, %84 : vector<8x1xf32>
    %86 = math.rsqrt %85 : vector<8x1xf32>
    %87 = arith.mulf %67, %86 : vector<8x1xf32>
    %88 = arith.mulf %74, %87 : vector<8x1xf32>
    %89 = arith.subf %68, %88 : vector<8x1xf32>
    %90 = vector.broadcast %87 : vector<8x1xf32> to vector<8x256xf32>
    %91 = arith.mulf %66, %90 : vector<8x256xf32>
    %92 = vector.broadcast %89 : vector<8x1xf32> to vector<8x256xf32>
    %93 = arith.addf %91, %92 : vector<8x256xf32>
    %cst_42 = arith.constant 0.000000e+00 : f32
    %94 = vector.broadcast %cst_42 : f32 to vector<8x256xf32>
    %95 = arith.maximumf %93, %94 : vector<8x256xf32>
    %96 = vector.broadcast %0 : vector<1x256xf32> to vector<8x256xf32>
    %97 = arith.mulf %95, %96 : vector<8x256xf32>
    %c0_43 = arith.constant 0 : index
    %c0_44 = arith.constant 0 : index
    %98 = vector.load %arg9[%c0_43, %c0_44] : memref<8x256xf32, #tpu.memory_space<vmem>>, vector<8x256xf32>
    tpu.vector_store %arg9[%c0_43, %c0_44], %97 {strides = array<i32>} : memref<8x256xf32, #tpu.memory_space<vmem>>, vector<8x256xf32>,
    return
  }
  func.func @transform_0(%arg0: i32) -> (i32, i32, i32) {
    %c0_i32 = arith.constant 0 : i32
    %c0_i32_0 = arith.constant 0 : i32
    %c0_i32_1 = arith.constant 0 : i32
    %c0_i32_2 = arith.constant 0 : i32
    return %c0_i32, %c0_i32_0, %c0_i32_1 : i32, i32, i32
  }
  func.func @transform_1(%arg0: i32) -> (i32, i32) {
    %c0_i32 = arith.constant 0 : i32
    %c0_i32_0 = arith.constant 0 : i32
    %c0_i32_1 = arith.constant 0 : i32
    return %c0_i32, %c0_i32_0 : i32, i32
  }
  func.func @transform_2(%arg0: i32) -> (i32, i32) {
    %c0_i32 = arith.constant 0 : i32
    %c0_i32_0 = arith.constant 0 : i32
    %c0_i32_1 = arith.constant 0 : i32
    return %c0_i32, %c0_i32_0 : i32, i32
  }
  func.func @transform_3(%arg0: i32) -> (i32, i32) {
    %c0_i32 = arith.constant 0 : i32
    %c0_i32_0 = arith.constant 0 : i32
    %c0_i32_1 = arith.constant 0 : i32
    return %c0_i32, %c0_i32_0 : i32, i32
  }
  func.func @transform_4(%arg0: i32) -> (i32, i32) {
    %c0_i32 = arith.constant 0 : i32
    %c0_i32_0 = arith.constant 0 : i32
    %c0_i32_1 = arith.constant 0 : i32
    return %c0_i32, %c0_i32_0 : i32, i32
  }
  func.func @transform_5(%arg0: i32) -> (i32, i32) {
    %c0_i32 = arith.constant 0 : i32
    %c0_i32_0 = arith.constant 0 : i32
    %c0_i32_1 = arith.constant 0 : i32
    return %c0_i32, %c0_i32_0 : i32, i32
  }
  func.func @transform_6(%arg0: i32) -> (i32, i32) {
    %c0_i32 = arith.constant 0 : i32
    %c0_i32_0 = arith.constant 0 : i32
    %c0_i32_1 = arith.constant 0 : i32
    return %c0_i32, %c0_i32_0 : i32, i32
  }
  func.func @transform_7(%arg0: i32) -> (i32, i32) {
    %c0_i32 = arith.constant 0 : i32
    %c0_i32_0 = arith.constant 0 : i32
    %c0_i32_1 = arith.constant 0 : i32
    return %c0_i32, %c0_i32_0 : i32, i32
  }
  func.func @transform_8(%arg0: i32) -> (i32, i32) {
    %c0_i32 = arith.constant 0 : i32
    %c0_i32_0 = arith.constant 0 : i32
    %c0_i32_1 = arith.constant 0 : i32
    return %c0_i32, %c0_i32_0 : i32, i32
  }
}

</mosaic_0001>

<llo_original>
// kernel: tpu_custom_call.1
$region0: #{tpu_custom_call.1}
  #allocation0 [shape = 'u32[]', space=smem, size = 0x4, offset = 0x4, fixed_abs, tag = 'smem constant byte address 0x4 - core index']
  #allocation1 [shape = 'u32[144,128]{1,0:T(1,128)}', space=vmem, size = 0x12000, scoped, tag = 'internal scratch']
  %s0 = inlined_call_operand.hbm [shape: f32[4,8,256], index: 0, kind: input, shape index: {}]
  %s1 = inlined_call_operand.vmem [shape: f32[1,256], index: 1, kind: input, shape index: {}]
  %s2 = inlined_call_operand.vmem [shape: bf16[8,72], index: 2, kind: input, shape index: {}]
  %s3 = inlined_call_operand.vmem [shape: f32[8,1], index: 3, kind: input, shape index: {}]
  %s4 = inlined_call_operand.vmem [shape: f32[8,1], index: 4, kind: input, shape index: {}]
  %s5 = inlined_call_operand.vmem [shape: bf16[8,72], index: 5, kind: input, shape index: {}]
  %s6 = inlined_call_operand.vmem [shape: f32[8,1], index: 6, kind: input, shape index: {}]
  %s7 = inlined_call_operand.vmem [shape: f32[8,1], index: 7, kind: input, shape index: {}]
  %s8 = inlined_call_operand.hbm [shape: f32[8,256], index: 8, kind: output, shape index: {}]
  %s9 = sld [smem:[#allocation0]]
  $region46: #{tpu_custom_call.1} parent=0
    _
  %s11 = ssub.s32 1, %s9
  %s12 = scalar_select 0, %s11, %s9
  $region1: #{tpu_custom_call.1} parent=0
    #allocation2 [shape = 'u8[32768]{0}', space=vmem, size = 0x8000, scoped, tag = 'input window, operand 0, single buffered']
    #allocation3 [shape = 's32[1]{0}', space=sflag, size = 0x4, scoped, tag = 'scoped memory for tpu_custom_call.1']
    #allocation4 [shape = 's32[1]{0}', space=sflag, size = 0x4, scoped, tag = 'scoped memory for tpu_custom_call.1']
    #allocation5 [shape = 'u8[8192]{0}', space=vmem, size = 0x2000, scoped, tag = 'output window, operand 0, single buffered']
    %13 = vsyncpa [#allocation3], 0
    %14 = vsyncpa [#allocation4], 0
    // Predicated region
    $region2: #{tpu_custom_call.1} parent=1 // pred_check
      _
    $region3: #{tpu_custom_call.1} parent=1 // pred_check_branch
      %16 = sbr.rel (0) target = $region5
    $region4: #{tpu_custom_call.1} parent=1 // pred_region
      %s18 = ssub.s32 1024, 1024
      %19 = vsyncadd [#allocation3], %s18
      %s20 = sshll.u32 [#allocation2], 4
      %s21 = int_to_ptr.vmem [resolvable:$true] %s20
      %26 = dma.hbm_to_vmem [thread:$0]  %s0, 1024, %s21, [#allocation3], 256, 256, 16
    $region5: #{tpu_custom_call.1} parent=1 // pred_fallthru
      _
    // Predicated region
    $region6: #{tpu_custom_call.1} parent=1 // pred_check
      _
    $region7: #{tpu_custom_call.1} parent=1 // pred_check_branch
      %28 = sbr.rel (0) target = $region9
    $region8: #{tpu_custom_call.1} parent=1 // pred_region
      _
    $region9: #{tpu_custom_call.1} parent=1 // pred_fallthru
      _
    // Predicated region
    $region10: #{tpu_custom_call.1} parent=1 // pred_check
      _
    $region11: #{tpu_custom_call.1} parent=1 // pred_check_branch
      %30 = sbr.rel (0) target = $region13
    $region12: #{tpu_custom_call.1} parent=1 // pred_region
      _
    $region13: #{tpu_custom_call.1} parent=1 // pred_fallthru
      _
    // Predicated region
    $region14: #{tpu_custom_call.1} parent=1 // pred_check
      _
    $region15: #{tpu_custom_call.1} parent=1 // pred_check_branch
      %32 = sbr.rel (0) target = $region17
    $region16: #{tpu_custom_call.1} parent=1 // pred_region
      _
    $region17: #{tpu_custom_call.1} parent=1 // pred_fallthru
      _
    // Predicated region
    $region18: #{tpu_custom_call.1} parent=1 // pred_check
      _
    $region19: #{tpu_custom_call.1} parent=1 // pred_check_branch
      %34 = sbr.rel (0) target = $region21
    $region20: #{tpu_custom_call.1} parent=1 // pred_region
      _
    $region21: #{tpu_custom_call.1} parent=1 // pred_fallthru
      _
    // Predicated region
    $region22: #{tpu_custom_call.1} parent=1 // pred_check
      _
    $region23: #{tpu_custom_call.1} parent=1 // pred_check_branch
      %36 = sbr.rel (0) target = $region25
    $region24: #{tpu_custom_call.1} parent=1 // pred_region
      _
    $region25: #{tpu_custom_call.1} parent=1 // pred_fallthru
      _
    // Predicated region
    $region26: #{tpu_custom_call.1} parent=1 // pred_check
      _
    $region27: #{tpu_custom_call.1} parent=1 // pred_check_branch
      %38 = sbr.rel (0) target = $region29
    $region28: #{tpu_custom_call.1} parent=1 // pred_region
      _
    $region29: #{tpu_custom_call.1} parent=1 // pred_fallthru
      _
    // Predicated region
    $region30: #{tpu_custom_call.1} parent=1 // pred_check
      _
    $region31: #{tpu_custom_call.1} parent=1 // pred_check_branch
      %40 = sbr.rel (0) target = $region33
    $region32: #{tpu_custom_call.1} parent=1 // pred_region
      _
    $region33: #{tpu_custom_call.1} parent=1 // pred_fallthru
      _
    // Predicated region
    $region34: #{tpu_custom_call.1} parent=1 // pred_check
      _
    $region35: #{tpu_custom_call.1} parent=1 // pred_check_branch
      %42 = sbr.rel (0) target = $region37
    $region36: #{tpu_custom_call.1} parent=1 // pred_region
      %43 = dma.done [#allocation3], 1024
    $region37: #{tpu_custom_call.1} parent=1 // pred_fallthru
      _
    %v45 = vld [vmem:[%s1] sm:$0x3]
    %v46 = vld [vmem:[#allocation2] sm:$0xff]
    %v47 = vld [vmem:[#allocation2 + $0x8] sm:$0xff]
    %s48 = scalar_lea.vmem [#allocation2], 16
    %v49 = vld [vmem:[%s48] sm:$0xff]
    %v50 = vld [vmem:[%s48 + $0x8] sm:$0xff]
    %v51 = vmax.f32 %v46, %v49
    %v52 = vmax.f32 %v47, %v50
    %s53 = scalar_lea.vmem [#allocation2], 32
    %v54 = vld [vmem:[%s53] sm:$0xff]
    %v55 = vld [vmem:[%s53 + $0x8] sm:$0xff]
    %s56 = scalar_lea.vmem [#allocation2], 48
    %v57 = vld [vmem:[%s56] sm:$0xff]
    %v58 = vld [vmem:[%s56 + $0x8] sm:$0xff]
    %v59 = vmax.f32 %v54, %v57
    %v60 = vmax.f32 %v55, %v58
    %v61 = vmax.f32 %v51, %v59
    %v62 = vmax.f32 %v52, %v60
    %v63 = vld [vmem:[%s2] sm:$0xf]
    %64 = vrot.lane.b32.xlu0 %v61, 11
    %v65 = vpop.permute.xlu0 %64
    %66 = vrot.lane.b32.xlu0 %v62, 11
    %v67 = vpop.permute.xlu0 %66
    %v68 = vlaneseq
    %v69 = vand.u32 %v68, 127
    %vm70 = vcmp.lt.s32.totalorder %v69, 11
    %v71 = vsel %vm70, %v65, %v67
    %v72 = vsel %vm70, %v67, %v65
    %73 = vrot.lane.b32.xlu0 %v61, 10
    %v74 = vpop.permute.xlu0 %73
    %75 = vrot.lane.b32.xlu0 %v62, 10
    %v76 = vpop.permute.xlu0 %75
    %vm77 = vcmp.lt.s32.totalorder %v69, 10
    %v78 = vsel %vm77, %v74, %v76
    %v79 = vsel %vm77, %v76, %v74
    %80 = vrot.lane.b32.xlu0 %v61, 9
    %v81 = vpop.permute.xlu0 %80
    %82 = vrot.lane.b32.xlu0 %v62, 9
    %v83 = vpop.permute.xlu0 %82
    %vm84 = vcmp.lt.s32.totalorder %v69, 9
    %v85 = vsel %vm84, %v81, %v83
    %v86 = vsel %vm84, %v83, %v81
    %87 = vrot.lane.b32.xlu0 %v61, 1
    %v88 = vpop.permute.xlu0 %87
    %89 = vrot.lane.b32.xlu0 %v62, 1
    %v90 = vpop.permute.xlu0 %89
    %vm91 = vcmp.lt.s32.totalorder %v69, 1
    %v92 = vsel %vm91, %v88, %v90
    %v93 = vsel %vm91, %v90, %v88
    %94 = vrot.lane.b32.xlu0 %v61, 127
    %v95 = vpop.permute.xlu0 %94
    %96 = vrot.lane.b32.xlu0 %v62, 127
    %v97 = vpop.permute.xlu0 %96
    %vm98 = vcmp.lt.s32.totalorder %v69, 127
    %v99 = vsel %vm98, %v95, %v97
    %v100 = vsel %vm98, %v97, %v95
    %101 = vrot.lane.b32.xlu0 %v61, 119
    %v102 = vpop.permute.xlu0 %101
    %103 = vrot.lane.b32.xlu0 %v62, 119
    %v104 = vpop.permute.xlu0 %103
    %vm105 = vcmp.lt.s32.totalorder %v69, 119
    %v106 = vsel %vm105, %v102, %v104
    %v107 = vsel %vm105, %v104, %v102
    %108 = vrot.lane.b32.xlu0 %v61, 118
    %v109 = vpop.permute.xlu0 %108
    %110 = vrot.lane.b32.xlu0 %v62, 118
    %v111 = vpop.permute.xlu0 %110
    %vm112 = vcmp.lt.s32.totalorder %v69, 118
    %v113 = vsel %vm112, %v109, %v111
    %v114 = vsel %vm112, %v111, %v109
    %115 = vrot.lane.b32.xlu0 %v61, 117
    %v116 = vpop.permute.xlu0 %115
    %117 = vrot.lane.b32.xlu0 %v62, 117
    %v118 = vpop.permute.xlu0 %117
    %vm119 = vcmp.lt.s32.totalorder %v69, 117
    %v120 = vsel %vm119, %v116, %v118
    %v121 = vsel %vm119, %v118, %v116
    %v122 = vpack.c.bf16 %v79, %v72
    %v123 = vpack.c.bf16 %v78, %v71
    %v124 = vpack.c.bf16 %v93, %v86
    %v125 = vpack.c.bf16 %v92, %v85
    %v126 = vpack.c.bf16 %v99, %v61
    %v127 = vpack.c.bf16 %v100, %v62
    %v128 = vpack.c.bf16 %v113, %v106
    %v129 = vpack.c.bf16 %v114, %v107
    %v130 = vpack.c.bf16 %v120, %v120
    %v131 = vpack.c.bf16 %v121, %v121
    %vm132 = vcmask 588800
    %v134 = vsel %vm132, %v63, 0
    %vm136 = vcmask 1043456
    %v138 = vsel %vm136, %v130, 0
    %v141 = vsel %vm136, %v131, 0
    %143 = vmatprep.subr.bf16.mxu0 0
    %144 = vmatpush1.bf16.msra.mxu0 0
    %145 = vmatprep.subr.bf16.mxu0 0
    %146 = vmatpush1.bf16.msra.mxu0 0
    %147 = vmatprep.subr.bf16.mxu0 0
    %148 = vmatpush1.bf16.msra.mxu0 0
    %149 = vmatprep.subr.bf16.mxu0 %v141
    %150 = vmatpush1.bf16.msra.mxu0 %v138
    %151 = vmatprep.subr.bf16.mxu0 %v129
    %152 = vmatpush1.bf16.msra.mxu0 %v128
    %153 = vmatprep.subr.bf16.mxu0 %v127
    %154 = vmatpush1.bf16.msra.mxu0 %v126
    %155 = vmatprep.subr.bf16.mxu0 %v125
    %156 = vmatpush1.bf16.msra.mxu0 %v124
    %157 = vmatprep.subr.bf16.mxu0 %v123
    %158 = vmatpush1.bf16.msra.mxu0 %v122
    %159 = vmatprep.subr.bf16.mxu0 0
    %160 = vmatpush2.bf16.msra.mxu0 0
    %161 = vmatprep.subr.bf16.mxu0 0
    %162 = vmatpush2.bf16.msra.mxu0 0
    %163 = vmatprep.subr.bf16.mxu0 0
    %164 = vmatpush2.bf16.msra.mxu0 0
    %165 = vmatprep.subr.bf16.mxu0 0
    %166 = vmatpush2.bf16.msra.mxu0 0
    %167 = vmatprep.subr.bf16.mxu0 0
    %168 = vmatpush2.bf16.msra.mxu0 0
    %169 = vmatprep.subr.bf16.mxu0 0
    %170 = vmatpush2.bf16.msra.mxu0 0
    %171 = vmatprep.subr.bf16.mxu0 0
    %172 = vmatpush2.bf16.msra.mxu0 0
    %173 = vmatprep.subr.bf16.mxu0 0
    %174 = vmatpush2.bf16.msra.mxu0 0
    %175 = vmatprep.mubr.bf16.mxu0 0
    %176 = vmatmul.mubr.bf16.gmra.mxu0 %v134
    %v177 = vpop.f32.mrf.mxu0
    %v178 = vadd.f32 0.0, %v177
    %v179 = vpop.f32.mrf.mxu0
    %v180 = vadd.f32 0.0, %v179
    %v181 = vpop.f32.mrf.mxu0
    %v182 = vpop.f32.mrf.mxu0
    %183 = vdwg.mxu0
    %v184 = vld [vmem:[%s3] sm:$0xff]
    %v185 = vld [vmem:[%s4] sm:$0xff]
    %v187 = vlaneseq
    %v188 = vshrl.u32 %v187, 7
    %v189 = vsub.s32 0, %v188
    %v190 = vrot.slane %v45, %v189
    %v191 = vlaneseq
    %v192 = vshrl.u32 %v191, 7
    %v193 = vsub.s32 1, %v192
    %v194 = vrot.slane %v45, %v193
    %v197 = vmul.f32 %v178, %v190
    %v198 = vmul.f32 %v180, %v194
    %v199 = vadd.f32 %v197, %v198
    %200 = vadd.xlane.f32.xlu0 %v199
    %v201 = vpop.xlane.xlu0 %200
    %v202 = vmul.f32 %v201, 0.0078125
    %v203 = vsub.f32 %v178, %v202
    %v204 = vsub.f32 %v180, %v202
    %v205 = vmul.f32 %v203, %v203
    %v206 = vmul.f32 %v204, %v204
    %v207 = vmul.f32 %v205, %v190
    %v208 = vmul.f32 %v206, %v194
    %v209 = vadd.f32 %v207, %v208
    %210 = vadd.xlane.f32.xlu0 %v209
    %v211 = vpop.xlane.xlu0 %210
    %v212 = vmul.f32 %v211, 0.0078125
    %v213 = vadd.f32 %v212, 1e-05
    %v214 = vrsqrt.pop %v213
    %v215 = vmul.f32 %v184, %v214
    %v216 = vmul.f32 %v202, %v215
    %v217 = vsub.f32 %v185, %v216
    %219 = vset.pattern.permute.xlu0 0
    %220 = vperm.xlu0 %219, %v215
    %v221 = vpop.permute.xlu0 %220
    %v223 = vmul.f32 %v178, %v221
    %v224 = vmul.f32 %v180, %v221
    %226 = vset.pattern.permute.xlu0 0
    %227 = vperm.xlu0 %226, %v217
    %v228 = vpop.permute.xlu0 %227
    %v230 = vadd.f32 %v223, %v228
    %v231 = vadd.f32 %v224, %v228
    %v232 = vmax.f32 %v230, 0.0
    %v233 = vmax.f32 %v231, 0.0
    %v234 = vmul.f32 %v232, %v190
    %v235 = vmul.f32 %v233, %v194
    %v236 = vld [vmem:[%s5] sm:$0xf]
    %237 = vrot.lane.b32.xlu0 %v234, 11
    %v238 = vpop.permute.xlu0 %237
    %239 = vrot.lane.b32.xlu0 %v235, 11
    %v240 = vpop.permute.xlu0 %239
    %v241 = vsel %vm70, %v238, %v240
    %v242 = vsel %vm70, %v240, %v238
    %243 = vrot.lane.b32.xlu0 %v234, 10
    %v244 = vpop.permute.xlu0 %243
    %245 = vrot.lane.b32.xlu0 %v235, 10
    %v246 = vpop.permute.xlu0 %245
    %v247 = vsel %vm77, %v244, %v246
    %v248 = vsel %vm77, %v246, %v244
    %249 = vrot.lane.b32.xlu0 %v234, 9
    %v250 = vpop.permute.xlu0 %249
    %251 = vrot.lane.b32.xlu0 %v235, 9
    %v252 = vpop.permute.xlu0 %251
    %v253 = vsel %vm84, %v250, %v252
    %v254 = vsel %vm84, %v252, %v250
    %255 = vrot.lane.b32.xlu0 %v234, 1
    %v256 = vpop.permute.xlu0 %255
    %257 = vrot.lane.b32.xlu0 %v235, 1
    %v258 = vpop.permute.xlu0 %257
    %v259 = vsel %vm91, %v256, %v258
    %v260 = vsel %vm91, %v258, %v256
    %261 = vrot.lane.b32.xlu0 %v234, 127
    %v262 = vpop.permute.xlu0 %261
    %263 = vrot.lane.b32.xlu0 %v235, 127
    %v264 = vpop.permute.xlu0 %263
    %v265 = vsel %vm98, %v262, %v264
    %v266 = vsel %vm98, %v264, %v262
    %267 = vrot.lane.b32.xlu0 %v234, 119
    %v268 = vpop.permute.xlu0 %267
    %269 = vrot.lane.b32.xlu0 %v235, 119
    %v270 = vpop.permute.xlu0 %269
    %v271 = vsel %vm105, %v268, %v270
    %v272 = vsel %vm105, %v270, %v268
    %273 = vrot.lane.b32.xlu0 %v234, 118
    %v274 = vpop.permute.xlu0 %273
    %275 = vrot.lane.b32.xlu0 %v235, 118
    %v276 = vpop.permute.xlu0 %275
    %v277 = vsel %vm112, %v274, %v276
    %v278 = vsel %vm112, %v276, %v274
    %279 = vrot.lane.b32.xlu0 %v234, 117
    %v280 = vpop.permute.xlu0 %279
    %281 = vrot.lane.b32.xlu0 %v235, 117
    %v282 = vpop.permute.xlu0 %281
    %v283 = vsel %vm119, %v280, %v282
    %v284 = vsel %vm119, %v282, %v280
    %v285 = vpack.c.bf16 %v248, %v242
    %v286 = vpack.c.bf16 %v247, %v241
    %v287 = vpack.c.bf16 %v260, %v254
    %v288 = vpack.c.bf16 %v259, %v253
    %v289 = vpack.c.bf16 %v265, %v234
    %v290 = vpack.c.bf16 %v266, %v235
    %v291 = vpack.c.bf16 %v277, %v271
    %v292 = vpack.c.bf16 %v278, %v272
    %v293 = vpack.c.bf16 %v283, %v283
    %v294 = vpack.c.bf16 %v284, %v284
    %v296 = vsel %vm132, %v236, 0
    %v299 = vsel %vm136, %v293, 0
    %v302 = vsel %vm136, %v294, 0
    %304 = vmatprep.subr.bf16.mxu0 0
    %305 = vmatpush1.bf16.msra.mxu0 0
    %306 = vmatprep.subr.bf16.mxu0 0
    %307 = vmatpush1.bf16.msra.mxu0 0
    %308 = vmatprep.subr.bf16.mxu0 0
    %309 = vmatpush1.bf16.msra.mxu0 0
    %310 = vmatprep.subr.bf16.mxu0 %v302
    %311 = vmatpush1.bf16.msra.mxu0 %v299
    %312 = vmatprep.subr.bf16.mxu0 %v292
    %313 = vmatpush1.bf16.msra.mxu0 %v291
    %314 = vmatprep.subr.bf16.mxu0 %v290
    %315 = vmatpush1.bf16.msra.mxu0 %v289
    %316 = vmatprep.subr.bf16.mxu0 %v288
    %317 = vmatpush1.bf16.msra.mxu0 %v287
    %318 = vmatprep.subr.bf16.mxu0 %v286
    %319 = vmatpush1.bf16.msra.mxu0 %v285
    %320 = vmatprep.subr.bf16.mxu0 0
    %321 = vmatpush2.bf16.msra.mxu0 0
    %322 = vmatprep.subr.bf16.mxu0 0
    %323 = vmatpush2.bf16.msra.mxu0 0
    %324 = vmatprep.subr.bf16.mxu0 0
    %325 = vmatpush2.bf16.msra.mxu0 0
    %326 = vmatprep.subr.bf16.mxu0 0
    %327 = vmatpush2.bf16.msra.mxu0 0
    %328 = vmatprep.subr.bf16.mxu0 0
    %329 = vmatpush2.bf16.msra.mxu0 0
    %330 = vmatprep.subr.bf16.mxu0 0
    %331 = vmatpush2.bf16.msra.mxu0 0
    %332 = vmatprep.subr.bf16.mxu0 0
    %333 = vmatpush2.bf16.msra.mxu0 0
    %334 = vmatprep.subr.bf16.mxu0 0
    %335 = vmatpush2.bf16.msra.mxu0 0
    %336 = vmatprep.mubr.bf16.mxu0 0
    %337 = vmatmul.mubr.bf16.gmra.mxu0 %v296
    %v338 = vpop.f32.mrf.mxu0
    %v339 = vadd.f32 0.0, %v338
    %v340 = vpop.f32.mrf.mxu0
    %v341 = vadd.f32 0.0, %v340
    %v342 = vpop.f32.mrf.mxu0
    %v343 = vpop.f32.mrf.mxu0
    %344 = vdwg.mxu0
    %v345 = vld [vmem:[%s6] sm:$0xff]
    %v346 = vld [vmem:[%s7] sm:$0xff]
    %v347 = vmul.f32 %v339, %v190
    %v348 = vmul.f32 %v341, %v194
    %v349 = vadd.f32 %v347, %v348
    %350 = vadd.xlane.f32.xlu0 %v349
    %v351 = vpop.xlane.xlu0 %350
    %v352 = vmul.f32 %v351, 0.0078125
    %v353 = vsub.f32 %v339, %v352
    %v354 = vsub.f32 %v341, %v352
    %v355 = vmul.f32 %v353, %v353
    %v356 = vmul.f32 %v354, %v354
    %v357 = vmul.f32 %v355, %v190
    %v358 = vmul.f32 %v356, %v194
    %v359 = vadd.f32 %v357, %v358
    %360 = vadd.xlane.f32.xlu0 %v359
    %v361 = vpop.xlane.xlu0 %360
    %v362 = vmul.f32 %v361, 0.0078125
    %v363 = vadd.f32 %v362, 1e-05
    %v364 = vrsqrt.pop %v363
    %v365 = vmul.f32 %v345, %v364
    %v366 = vmul.f32 %v352, %v365
    %v367 = vsub.f32 %v346, %v366
    %369 = vset.pattern.permute.xlu0 0
    %370 = vperm.xlu0 %369, %v365
    %v371 = vpop.permute.xlu0 %370
    %v373 = vmul.f32 %v339, %v371
    %v374 = vmul.f32 %v341, %v371
    %376 = vset.pattern.permute.xlu0 0
    %377 = vperm.xlu0 %376, %v367
    %v378 = vpop.permute.xlu0 %377
    %v380 = vadd.f32 %v373, %v378
    %v381 = vadd.f32 %v374, %v378
    %v382 = vmax.f32 %v380, 0.0
    %v383 = vmax.f32 %v381, 0.0
    %v384 = vmul.f32 %v382, %v190
    %v385 = vmul.f32 %v383, %v194
    %386 = vst [vmem:[#allocation5] sm:$0xff] %v384
    %387 = vst [vmem:[#allocation5 + $0x8] sm:$0xff] %v385
    // Predicated region
    $region38: #{tpu_custom_call.1} parent=1 // pred_check
      _
    $region39: #{tpu_custom_call.1} parent=1 // pred_check_branch
      %389 = sbr.rel (0) target = $region41
    $region40: #{tpu_custom_call.1} parent=1 // pred_region
      %s391 = ssub.s32 256, 256
      %392 = vsyncadd [#allocation4], %s391
      %s394 = sshll.u32 [#allocation5], 4
      %s395 = int_to_ptr.vmem [resolvable:$true] %s394
      %397 = dma.vmem_to_hbm [thread:$0]  %s395, 256, %s8, [#allocation4]
    $region41: #{tpu_custom_call.1} parent=1 // pred_fallthru
      _
    // Predicated region
    $region42: #{tpu_custom_call.1} parent=1 // pred_check
      _
    $region43: #{tpu_custom_call.1} parent=1 // pred_check_branch
      %399 = sbr.rel (0) target = $region45
    $region44: #{tpu_custom_call.1} parent=1 // pred_region
      %400 = dma.done [#allocation4], 256
    $region45: #{tpu_custom_call.1} parent=1 // pred_fallthru
      _
    %401 = vsyncpa [#allocation3], 1
    %402 = vsyncpa [#allocation4], 1

</llo_original>
